<compile_context>
chip_gen: v6e
topology: v6e:2x2x1
jax: 0.10.0
libtpu: 0.0.40
codegen_flags: <defaults>
</compile_context>

<pallas_src>
import jax
import jax.numpy as jnp
from jax.experimental import pallas as pl
from jax.experimental.pallas import tpu as pltpu

VOCAB_SIZE = 30000
VOCAB_DIM = 768
SEQ_LEN = 8


def _make_gather_kernel(n: int):
    """Gather kernel for a statically-known number of real ids `n` (1 <= n <= 8)."""
    n_pad = SEQ_LEN - n

    def kernel(ids_ref, table_ref, out_ref, sem):
        # ids_ref:   SMEM (n,) int32   (scalar prefetch)
        # table_ref: raw HBM ref [vocab, dim]
        # out_ref:   raw HBM ref [8, dim]   (final output buffer — no VMEM staging)
        # sem:       single shared DMA semaphore

        # Read + clamp every SMEM scalar up front (scalar ALU slots are idle; done before
        # any DMA wait so no scalar load sits behind a .wait()).  Clamping guarantees a
        # garbage id can never trigger an out-of-bounds HBM DMA.
        row_ids = [
            jnp.minimum(jnp.maximum(ids_ref[i], 0), VOCAB_SIZE - 1)
            for i in range(n)
        ]

        copies = []

        # Static front padding: table row 0 -> output rows [0, n_pad).
        for i in range(n_pad):
            cp = pltpu.make_async_copy(table_ref.at[0], out_ref.at[i], sem)
            cp.start()
            copies.append(cp)

        # Data-dependent rows -> output rows [n_pad, 8).
        for i in range(n):
            cp = pltpu.make_async_copy(
                table_ref.at[row_ids[i]], out_ref.at[n_pad + i], sem)
            cp.start()
            copies.append(cp)

        # All starts issued before any wait; wait on the SAME descriptors that were started.
        # (All copies are the same size and share one semaphore, so the sequential waits
        # collectively drain exactly the total signalled count before the kernel ends.)
        for cp in copies:
            cp.wait()

    return kernel


def _embedding_gather(ids_i32, table):
    n = ids_i32.shape[0]
    kernel = _make_gather_kernel(n)
    return pl.pallas_call(
        kernel,
        out_shape=jax.ShapeDtypeStruct((SEQ_LEN, VOCAB_DIM), table.dtype),
        grid_spec=pltpu.PrefetchScalarGridSpec(
            num_scalar_prefetch=1,
            grid=(1,),
            in_specs=[pl.BlockSpec(memory_space=pl.ANY)],    # table stays in HBM
            out_specs=pl.BlockSpec(memory_space=pl.ANY),     # output stays in HBM (direct DMA)
            scratch_shapes=[pltpu.SemaphoreType.DMA(())],    # one shared DMA semaphore
        ),
        compiler_params=pltpu.CompilerParams(has_side_effects=True),
        cost_estimate=pl.CostEstimate(
            flops=0,
            transcendentals=0,
            bytes_accessed=2 * SEQ_LEN * VOCAB_DIM * 4,      # read 8 rows + write 8 rows
        ),
    )(ids_i32, table)


@jax.jit
def preprocessing_forward(x, embedding_table):
    """Mirror of Preprocessing.forward.

    x: 1-D float array of token ids, length n <= 8 (n is static per trace).
    Semantics: front-pad with zeros to length 8, cast to integer ids, gather embeddings.
    Returns: [8, 768] float32.
    """
    n = x.shape[0]
    if n > SEQ_LEN:
        raise ValueError(f"sequence length {n} > {SEQ_LEN}")
    if n == 0:
        # Degenerate all-padding case: 8 copies of embedding row 0 (no kernel needed).
        return jnp.broadcast_to(embedding_table[0], (SEQ_LEN, VOCAB_DIM))
    # Cast stays in the wrapper (exact for VOCAB_SIZE < 2^24); the clamp that protects the
    # HBM DMA index runs inside the kernel's scalar path.  Negative / NaN ids clamp to row 0
    # (intentional divergence: PyTorch nn.Embedding would raise an index error).
    ids = x.astype(jnp.int32)
    return _embedding_gather(ids, embedding_table)


if __name__ == "__main__":
    key = jax.random.PRNGKey(0)
    k_tab, k_ids = jax.random.split(key)

    # Deterministic synthetic embedding table (nn.Embedding default: N(0,1)).
    embedding_table = jax.random.normal(k_tab, (VOCAB_SIZE, VOCAB_DIM), dtype=jnp.float32)

    def ref_forward(x):
        n = x.shape[0]
        padded = jnp.concatenate(
            [jnp.zeros((SEQ_LEN - n,), jnp.float32), x.astype(jnp.float32)]).astype(jnp.int32)
        return embedding_table[padded]

    # Case 1: length-5 input (padded path: 3 pad DMAs + 5 gather DMAs, all HBM->HBM).
    ids5 = jax.random.randint(k_ids, (5,), 0, VOCAB_SIZE)
    x5 = ids5.astype(jnp.float32)
    out5 = jax.block_until_ready(preprocessing_forward(x5, embedding_table))
    assert out5.shape == (SEQ_LEN, VOCAB_DIM)
    assert jnp.allclose(out5, ref_forward(x5)), "mismatch vs reference gather (n=5)"

    # Case 2: full length-8 input (no padding: 8 gather DMAs).
    ids8 = jax.random.randint(jax.random.PRNGKey(1), (8,), 0, VOCAB_SIZE)
    x8 = ids8.astype(jnp.float32)
    out8 = jax.block_until_ready(preprocessing_forward(x8, embedding_table))
    assert jnp.allclose(out8, ref_forward(x8)), "mismatch vs reference gather (n=8)"

    print("KERNEL_OK")
</pallas_src>

<mosaic_0001>
module attributes {stable_mosaic.version = 11 : i64} {
  func.func @kernel(%arg0: i32, %arg1: memref<5xi32, #tpu.memory_space<smem>>, %arg2: memref<30000x768xf32, #tpu.memory_space<any>>, %arg3: memref<8x768xf32, #tpu.memory_space<any>>, %arg4: memref<!tpu.dma_semaphore, #tpu.memory_space<semaphore_mem>>) attributes {dimension_semantics = [#tpu.dimension_semantics<arbitrary>], iteration_bounds = array<i64: 1>, scalar_prefetch = 1 : i64, scratch_operands = 1 : i64, tpu.core_type = #tpu.core_type<tc>, window_params = [{}, {}]} {
    %c0 = arith.constant 0 : index
    %0 = memref.load %arg1[%c0] : memref<5xi32, #tpu.memory_space<smem>>
    %c0_i32 = arith.constant 0 : i32
    %1 = arith.maxsi %0, %c0_i32 : i32
    %c29999_i32 = arith.constant 29999 : i32
    %2 = arith.minsi %1, %c29999_i32 : i32
    %c1 = arith.constant 1 : index
    %3 = memref.load %arg1[%c1] : memref<5xi32, #tpu.memory_space<smem>>
    %c0_i32_0 = arith.constant 0 : i32
    %4 = arith.maxsi %3, %c0_i32_0 : i32
    %c29999_i32_1 = arith.constant 29999 : i32
    %5 = arith.minsi %4, %c29999_i32_1 : i32
    %c2 = arith.constant 2 : index
    %6 = memref.load %arg1[%c2] : memref<5xi32, #tpu.memory_space<smem>>
    %c0_i32_2 = arith.constant 0 : i32
    %7 = arith.maxsi %6, %c0_i32_2 : i32
    %c29999_i32_3 = arith.constant 29999 : i32
    %8 = arith.minsi %7, %c29999_i32_3 : i32
    %c3 = arith.constant 3 : index
    %9 = memref.load %arg1[%c3] : memref<5xi32, #tpu.memory_space<smem>>
    %c0_i32_4 = arith.constant 0 : i32
    %10 = arith.maxsi %9, %c0_i32_4 : i32
    %c29999_i32_5 = arith.constant 29999 : i32
    %11 = arith.minsi %10, %c29999_i32_5 : i32
    %c4 = arith.constant 4 : index
    %12 = memref.load %arg1[%c4] : memref<5xi32, #tpu.memory_space<smem>>
    %c0_i32_6 = arith.constant 0 : i32
    %13 = arith.maxsi %12, %c0_i32_6 : i32
    %c29999_i32_7 = arith.constant 29999 : i32
    %14 = arith.minsi %13, %c29999_i32_7 : i32
    %c0_i32_8 = arith.constant 0 : i32
    %c0_i32_9 = arith.constant 0 : i32
    %c0_i32_10 = arith.constant 0 : i32
    %15 = tpu.memref_slice %arg2[%c0_i32_8, %c0_i32_10] : memref<30000x768xf32, #tpu.memory_space<any>> -> memref<1x768xf32, #tpu.memory_space<any>>
    %16 = tpu.memref_squeeze %15 : memref<1x768xf32, #tpu.memory_space<any>> -> memref<768xf32, #tpu.memory_space<any>>
    %c0_i32_11 = arith.constant 0 : i32
    %17 = tpu.memref_slice %arg3[%c0_i32_9, %c0_i32_11] : memref<8x768xf32, #tpu.memory_space<any>> -> memref<1x768xf32, #tpu.memory_space<any>>
    %18 = tpu.memref_squeeze %17 : memref<1x768xf32, #tpu.memory_space<any>> -> memref<768xf32, #tpu.memory_space<any>>
    tpu.enqueue_dma source(%16 : memref<768xf32, #tpu.memory_space<any>>) target(%18 : memref<768xf32, #tpu.memory_space<any>>) target_semaphore(%arg4 : memref<!tpu.dma_semaphore, #tpu.memory_space<semaphore_mem>>)
    %c0_i32_12 = arith.constant 0 : i32
    %c1_i32 = arith.constant 1 : i32
    %c0_i32_13 = arith.constant 0 : i32
    %19 = tpu.memref_slice %arg2[%c0_i32_12, %c0_i32_13] : memref<30000x768xf32, #tpu.memory_space<any>> -> memref<1x768xf32, #tpu.memory_space<any>>
    %20 = tpu.memref_squeeze %19 : memref<1x768xf32, #tpu.memory_space<any>> -> memref<768xf32, #tpu.memory_space<any>>
    %c0_i32_14 = arith.constant 0 : i32
    %21 = tpu.memref_slice %arg3[%c1_i32, %c0_i32_14] : memref<8x768xf32, #tpu.memory_space<any>> -> memref<1x768xf32, #tpu.memory_space<any>>
    %22 = tpu.memref_squeeze %21 : memref<1x768xf32, #tpu.memory_space<any>> -> memref<768xf32, #tpu.memory_space<any>>
    tpu.enqueue_dma source(%20 : memref<768xf32, #tpu.memory_space<any>>) target(%22 : memref<768xf32, #tpu.memory_space<any>>) target_semaphore(%arg4 : memref<!tpu.dma_semaphore, #tpu.memory_space<semaphore_mem>>)
    %c0_i32_15 = arith.constant 0 : i32
    %c2_i32 = arith.constant 2 : i32
    %c0_i32_16 = arith.constant 0 : i32
    %23 = tpu.memref_slice %arg2[%c0_i32_15, %c0_i32_16] : memref<30000x768xf32, #tpu.memory_space<any>> -> memref<1x768xf32, #tpu.memory_space<any>>
    %24 = tpu.memref_squeeze %23 : memref<1x768xf32, #tpu.memory_space<any>> -> memref<768xf32, #tpu.memory_space<any>>
    %c0_i32_17 = arith.constant 0 : i32
    %25 = tpu.memref_slice %arg3[%c2_i32, %c0_i32_17] : memref<8x768xf32, #tpu.memory_space<any>> -> memref<1x768xf32, #tpu.memory_space<any>>
    %26 = tpu.memref_squeeze %25 : memref<1x768xf32, #tpu.memory_space<any>> -> memref<768xf32, #tpu.memory_space<any>>
    tpu.enqueue_dma source(%24 : memref<768xf32, #tpu.memory_space<any>>) target(%26 : memref<768xf32, #tpu.memory_space<any>>) target_semaphore(%arg4 : memref<!tpu.dma_semaphore, #tpu.memory_space<semaphore_mem>>)
    %c3_i32 = arith.constant 3 : i32
    %c0_i32_18 = arith.constant 0 : i32
    %27 = tpu.memref_slice %arg2[%2, %c0_i32_18] : memref<30000x768xf32, #tpu.memory_space<any>> -> memref<1x768xf32, #tpu.memory_space<any>>
    %28 = tpu.memref_squeeze %27 : memref<1x768xf32, #tpu.memory_space<any>> -> memref<768xf32, #tpu.memory_space<any>>
    %c0_i32_19 = arith.constant 0 : i32
    %29 = tpu.memref_slice %arg3[%c3_i32, %c0_i32_19] : memref<8x768xf32, #tpu.memory_space<any>> -> memref<1x768xf32, #tpu.memory_space<any>>
    %30 = tpu.memref_squeeze %29 : memref<1x768xf32, #tpu.memory_space<any>> -> memref<768xf32, #tpu.memory_space<any>>
    tpu.enqueue_dma source(%28 : memref<768xf32, #tpu.memory_space<any>>) target(%30 : memref<768xf32, #tpu.memory_space<any>>) target_semaphore(%arg4 : memref<!tpu.dma_semaphore, #tpu.memory_space<semaphore_mem>>)
    %c4_i32 = arith.constant 4 : i32
    %c0_i32_20 = arith.constant 0 : i32
    %31 = tpu.memref_slice %arg2[%5, %c0_i32_20] : memref<30000x768xf32, #tpu.memory_space<any>> -> memref<1x768xf32, #tpu.memory_space<any>>
    %32 = tpu.memref_squeeze %31 : memref<1x768xf32, #tpu.memory_space<any>> -> memref<768xf32, #tpu.memory_space<any>>
    %c0_i32_21 = arith.constant 0 : i32
    %33 = tpu.memref_slice %arg3[%c4_i32, %c0_i32_21] : memref<8x768xf32, #tpu.memory_space<any>> -> memref<1x768xf32, #tpu.memory_space<any>>
    %34 = tpu.memref_squeeze %33 : memref<1x768xf32, #tpu.memory_space<any>> -> memref<768xf32, #tpu.memory_space<any>>
    tpu.enqueue_dma source(%32 : memref<768xf32, #tpu.memory_space<any>>) target(%34 : memref<768xf32, #tpu.memory_space<any>>) target_semaphore(%arg4 : memref<!tpu.dma_semaphore, #tpu.memory_space<semaphore_mem>>)
    %c5_i32 = arith.constant 5 : i32
    %c0_i32_22 = arith.constant 0 : i32
    %35 = tpu.memref_slice %arg2[%8, %c0_i32_22] : memref<30000x768xf32, #tpu.memory_space<any>> -> memref<1x768xf32, #tpu.memory_space<any>>
    %36 = tpu.memref_squeeze %35 : memref<1x768xf32, #tpu.memory_space<any>> -> memref<768xf32, #tpu.memory_space<any>>
    %c0_i32_23 = arith.constant 0 : i32
    %37 = tpu.memref_slice %arg3[%c5_i32, %c0_i32_23] : memref<8x768xf32, #tpu.memory_space<any>> -> memref<1x768xf32, #tpu.memory_space<any>>
    %38 = tpu.memref_squeeze %37 : memref<1x768xf32, #tpu.memory_space<any>> -> memref<768xf32, #tpu.memory_space<any>>
    tpu.enqueue_dma source(%36 : memref<768xf32, #tpu.memory_space<any>>) target(%38 : memref<768xf32, #tpu.memory_space<any>>) target_semaphore(%arg4 : memref<!tpu.dma_semaphore, #tpu.memory_space<semaphore_mem>>)
    %c6_i32 = arith.constant 6 : i32
    %c0_i32_24 = arith.constant 0 : i32
    %39 = tpu.memref_slice %arg2[%11, %c0_i32_24] : memref<30000x768xf32, #tpu.memory_space<any>> -> memref<1x768xf32, #tpu.memory_space<any>>
    %40 = tpu.memref_squeeze %39 : memref<1x768xf32, #tpu.memory_space<any>> -> memref<768xf32, #tpu.memory_space<any>>
    %c0_i32_25 = arith.constant 0 : i32
    %41 = tpu.memref_slice %arg3[%c6_i32, %c0_i32_25] : memref<8x768xf32, #tpu.memory_space<any>> -> memref<1x768xf32, #tpu.memory_space<any>>
    %42 = tpu.memref_squeeze %41 : memref<1x768xf32, #tpu.memory_space<any>> -> memref<768xf32, #tpu.memory_space<any>>
    tpu.enqueue_dma source(%40 : memref<768xf32, #tpu.memory_space<any>>) target(%42 : memref<768xf32, #tpu.memory_space<any>>) target_semaphore(%arg4 : memref<!tpu.dma_semaphore, #tpu.memory_space<semaphore_mem>>)
    %c7_i32 = arith.constant 7 : i32
    %c0_i32_26 = arith.constant 0 : i32
    %43 = tpu.memref_slice %arg2[%14, %c0_i32_26] : memref<30000x768xf32, #tpu.memory_space<any>> -> memref<1x768xf32, #tpu.memory_space<any>>
    %44 = tpu.memref_squeeze %43 : memref<1x768xf32, #tpu.memory_space<any>> -> memref<768xf32, #tpu.memory_space<any>>
    %c0_i32_27 = arith.constant 0 : i32
    %45 = tpu.memref_slice %arg3[%c7_i32, %c0_i32_27] : memref<8x768xf32, #tpu.memory_space<any>> -> memref<1x768xf32, #tpu.memory_space<any>>
    %46 = tpu.memref_squeeze %45 : memref<1x768xf32, #tpu.memory_space<any>> -> memref<768xf32, #tpu.memory_space<any>>
    tpu.enqueue_dma source(%44 : memref<768xf32, #tpu.memory_space<any>>) target(%46 : memref<768xf32, #tpu.memory_space<any>>) target_semaphore(%arg4 : memref<!tpu.dma_semaphore, #tpu.memory_space<semaphore_mem>>)
    %c0_i32_28 = arith.constant 0 : i32
    %c0_i32_29 = arith.constant 0 : i32
    %c0_i32_30 = arith.constant 0 : i32
    %47 = tpu.memref_slice %arg2[%c0_i32_28, %c0_i32_30] : memref<30000x768xf32, #tpu.memory_space<any>> -> memref<1x768xf32, #tpu.memory_space<any>>
    %48 = tpu.memref_squeeze %47 : memref<1x768xf32, #tpu.memory_space<any>> -> memref<768xf32, #tpu.memory_space<any>>
    %c0_i32_31 = arith.constant 0 : i32
    %49 = tpu.memref_slice %arg3[%c0_i32_29, %c0_i32_31] : memref<8x768xf32, #tpu.memory_space<any>> -> memref<1x768xf32, #tpu.memory_space<any>>
    %50 = tpu.memref_squeeze %49 : memref<1x768xf32, #tpu.memory_space<any>> -> memref<768xf32, #tpu.memory_space<any>>
    tpu.wait_dma2 semaphore(%arg4 : memref<!tpu.dma_semaphore, #tpu.memory_space<semaphore_mem>>) src(%48 : memref<768xf32, #tpu.memory_space<any>>) dst(%50 : memref<768xf32, #tpu.memory_space<any>>)
    %c0_i32_32 = arith.constant 0 : i32
    %c1_i32_33 = arith.constant 1 : i32
    %c0_i32_34 = arith.constant 0 : i32
    %51 = tpu.memref_slice %arg2[%c0_i32_32, %c0_i32_34] : memref<30000x768xf32, #tpu.memory_space<any>> -> memref<1x768xf32, #tpu.memory_space<any>>
    %52 = tpu.memref_squeeze %51 : memref<1x768xf32, #tpu.memory_space<any>> -> memref<768xf32, #tpu.memory_space<any>>
    %c0_i32_35 = arith.constant 0 : i32
    %53 = tpu.memref_slice %arg3[%c1_i32_33, %c0_i32_35] : memref<8x768xf32, #tpu.memory_space<any>> -> memref<1x768xf32, #tpu.memory_space<any>>
    %54 = tpu.memref_squeeze %53 : memref<1x768xf32, #tpu.memory_space<any>> -> memref<768xf32, #tpu.memory_space<any>>
    tpu.wait_dma2 semaphore(%arg4 : memref<!tpu.dma_semaphore, #tpu.memory_space<semaphore_mem>>) src(%52 : memref<768xf32, #tpu.memory_space<any>>) dst(%54 : memref<768xf32, #tpu.memory_space<any>>)
    %c0_i32_36 = arith.constant 0 : i32
    %c2_i32_37 = arith.constant 2 : i32
    %c0_i32_38 = arith.constant 0 : i32
    %55 = tpu.memref_slice %arg2[%c0_i32_36, %c0_i32_38] : memref<30000x768xf32, #tpu.memory_space<any>> -> memref<1x768xf32, #tpu.memory_space<any>>
    %56 = tpu.memref_squeeze %55 : memref<1x768xf32, #tpu.memory_space<any>> -> memref<768xf32, #tpu.memory_space<any>>
    %c0_i32_39 = arith.constant 0 : i32
    %57 = tpu.memref_slice %arg3[%c2_i32_37, %c0_i32_39] : memref<8x768xf32, #tpu.memory_space<any>> -> memref<1x768xf32, #tpu.memory_space<any>>
    %58 = tpu.memref_squeeze %57 : memref<1x768xf32, #tpu.memory_space<any>> -> memref<768xf32, #tpu.memory_space<any>>
    tpu.wait_dma2 semaphore(%arg4 : memref<!tpu.dma_semaphore, #tpu.memory_space<semaphore_mem>>) src(%56 : memref<768xf32, #tpu.memory_space<any>>) dst(%58 : memref<768xf32, #tpu.memory_space<any>>)
    %c3_i32_40 = arith.constant 3 : i32
    %c0_i32_41 = arith.constant 0 : i32
    %59 = tpu.memref_slice %arg2[%2, %c0_i32_41] : memref<30000x768xf32, #tpu.memory_space<any>> -> memref<1x768xf32, #tpu.memory_space<any>>
    %60 = tpu.memref_squeeze %59 : memref<1x768xf32, #tpu.memory_space<any>> -> memref<768xf32, #tpu.memory_space<any>>
    %c0_i32_42 = arith.constant 0 : i32
    %61 = tpu.memref_slice %arg3[%c3_i32_40, %c0_i32_42] : memref<8x768xf32, #tpu.memory_space<any>> -> memref<1x768xf32, #tpu.memory_space<any>>
    %62 = tpu.memref_squeeze %61 : memref<1x768xf32, #tpu.memory_space<any>> -> memref<768xf32, #tpu.memory_space<any>>
    tpu.wait_dma2 semaphore(%arg4 : memref<!tpu.dma_semaphore, #tpu.memory_space<semaphore_mem>>) src(%60 : memref<768xf32, #tpu.memory_space<any>>) dst(%62 : memref<768xf32, #tpu.memory_space<any>>)
    %c4_i32_43 = arith.constant 4 : i32
    %c0_i32_44 = arith.constant 0 : i32
    %63 = tpu.memref_slice %arg2[%5, %c0_i32_44] : memref<30000x768xf32, #tpu.memory_space<any>> -> memref<1x768xf32, #tpu.memory_space<any>>
    %64 = tpu.memref_squeeze %63 : memref<1x768xf32, #tpu.memory_space<any>> -> memref<768xf32, #tpu.memory_space<any>>
    %c0_i32_45 = arith.constant 0 : i32
    %65 = tpu.memref_slice %arg3[%c4_i32_43, %c0_i32_45] : memref<8x768xf32, #tpu.memory_space<any>> -> memref<1x768xf32, #tpu.memory_space<any>>
    %66 = tpu.memref_squeeze %65 : memref<1x768xf32, #tpu.memory_space<any>> -> memref<768xf32, #tpu.memory_space<any>>
    tpu.wait_dma2 semaphore(%arg4 : memref<!tpu.dma_semaphore, #tpu.memory_space<semaphore_mem>>) src(%64 : memref<768xf32, #tpu.memory_space<any>>) dst(%66 : memref<768xf32, #tpu.memory_space<any>>)
    %c5_i32_46 = arith.constant 5 : i32
    %c0_i32_47 = arith.constant 0 : i32
    %67 = tpu.memref_slice %arg2[%8, %c0_i32_47] : memref<30000x768xf32, #tpu.memory_space<any>> -> memref<1x768xf32, #tpu.memory_space<any>>
    %68 = tpu.memref_squeeze %67 : memref<1x768xf32, #tpu.memory_space<any>> -> memref<768xf32, #tpu.memory_space<any>>
    %c0_i32_48 = arith.constant 0 : i32
    %69 = tpu.memref_slice %arg3[%c5_i32_46, %c0_i32_48] : memref<8x768xf32, #tpu.memory_space<any>> -> memref<1x768xf32, #tpu.memory_space<any>>
    %70 = tpu.memref_squeeze %69 : memref<1x768xf32, #tpu.memory_space<any>> -> memref<768xf32, #tpu.memory_space<any>>
    tpu.wait_dma2 semaphore(%arg4 : memref<!tpu.dma_semaphore, #tpu.memory_space<semaphore_mem>>) src(%68 : memref<768xf32, #tpu.memory_space<any>>) dst(%70 : memref<768xf32, #tpu.memory_space<any>>)
    %c6_i32_49 = arith.constant 6 : i32
    %c0_i32_50 = arith.constant 0 : i32
    %71 = tpu.memref_slice %arg2[%11, %c0_i32_50] : memref<30000x768xf32, #tpu.memory_space<any>> -> memref<1x768xf32, #tpu.memory_space<any>>
    %72 = tpu.memref_squeeze %71 : memref<1x768xf32, #tpu.memory_space<any>> -> memref<768xf32, #tpu.memory_space<any>>
    %c0_i32_51 = arith.constant 0 : i32
    %73 = tpu.memref_slice %arg3[%c6_i32_49, %c0_i32_51] : memref<8x768xf32, #tpu.memory_space<any>> -> memref<1x768xf32, #tpu.memory_space<any>>
    %74 = tpu.memref_squeeze %73 : memref<1x768xf32, #tpu.memory_space<any>> -> memref<768xf32, #tpu.memory_space<any>>
    tpu.wait_dma2 semaphore(%arg4 : memref<!tpu.dma_semaphore, #tpu.memory_space<semaphore_mem>>) src(%72 : memref<768xf32, #tpu.memory_space<any>>) dst(%74 : memref<768xf32, #tpu.memory_space<any>>)
    %c7_i32_52 = arith.constant 7 : i32
    %c0_i32_53 = arith.constant 0 : i32
    %75 = tpu.memref_slice %arg2[%14, %c0_i32_53] : memref<30000x768xf32, #tpu.memory_space<any>> -> memref<1x768xf32, #tpu.memory_space<any>>
    %76 = tpu.memref_squeeze %75 : memref<1x768xf32, #tpu.memory_space<any>> -> memref<768xf32, #tpu.memory_space<any>>
    %c0_i32_54 = arith.constant 0 : i32
    %77 = tpu.memref_slice %arg3[%c7_i32_52, %c0_i32_54] : memref<8x768xf32, #tpu.memory_space<any>> -> memref<1x768xf32, #tpu.memory_space<any>>
    %78 = tpu.memref_squeeze %77 : memref<1x768xf32, #tpu.memory_space<any>> -> memref<768xf32, #tpu.memory_space<any>>
    tpu.wait_dma2 semaphore(%arg4 : memref<!tpu.dma_semaphore, #tpu.memory_space<semaphore_mem>>) src(%76 : memref<768xf32, #tpu.memory_space<any>>) dst(%78 : memref<768xf32, #tpu.memory_space<any>>)
    return
  }
}

</mosaic_0001>

<llo_original>
// kernel: preprocessing_forward.1
$region0: #{preprocessing_forward.1}
  #allocation0 [shape = 'u32[]', space=smem, size = 0x4, offset = 0x4, fixed_abs, tag = 'smem constant byte address 0x4 - core index']
  #allocation1 [shape = 'u32[144,128]{1,0:T(1,128)}', space=vmem, size = 0x12000, scoped, tag = 'internal scratch']
  #allocation2 [shape = 's32[1]{0}', space=sflag, size = 0x4, scoped, tag = 'scratch operand']
  #allocation3 [shape = 's32[1]{0}', space=sflag, size = 0x4, scoped, tag = 'scoped memory for preprocessing_forward.1']
  #allocation4 [shape = 'u8[512]{0}', space=smem, size = 0x200, scoped, tag = 'prefetched SMEM operand 0']
  #allocation5 [shape = 's32[]', space=sflag, size = 0x4, offset = 0, fixed_abs, tag = 'sflag constant byte address 0x0 - dummy sync flag']
  #allocation7 [shape = 's32[]', space=sflag, size = 0x4, offset = 0, fixed_abs, tag = 'sflag constant byte address 0x0 - dummy sync flag']
  #allocation9 [shape = 's32[]', space=sflag, size = 0x4, offset = 0, fixed_abs, tag = 'sflag constant byte address 0x0 - dummy sync flag']
  #allocation11 [shape = 's32[]', space=sflag, size = 0x4, offset = 0, fixed_abs, tag = 'sflag constant byte address 0x0 - dummy sync flag']
  #allocation13 [shape = 's32[]', space=sflag, size = 0x4, offset = 0, fixed_abs, tag = 'sflag constant byte address 0x0 - dummy sync flag']
  #allocation15 [shape = 's32[]', space=sflag, size = 0x4, offset = 0, fixed_abs, tag = 'sflag constant byte address 0x0 - dummy sync flag']
  #allocation17 [shape = 's32[]', space=sflag, size = 0x4, offset = 0, fixed_abs, tag = 'sflag constant byte address 0x0 - dummy sync flag']
  #allocation19 [shape = 's32[]', space=sflag, size = 0x4, offset = 0, fixed_abs, tag = 'sflag constant byte address 0x0 - dummy sync flag']
  %s0 = inlined_call_operand.vmem [shape: s32[5], index: 0, kind: input, shape index: {}]
  %s1 = inlined_call_operand.hbm [shape: f32[30000,768], index: 1, kind: input, shape index: {}]
  %s2 = inlined_call_operand.hbm [shape: f32[8,768], index: 2, kind: output, shape index: {}]
  %s3 = sld [smem:[#allocation0]]
  $region2: #{preprocessing_forward.1} parent=0
    _
  %s5 = ssub.s32 1, %s3
  %s6 = scalar_select 0, %s5, %s3
  %s7 = sshll.u32 %s0, 4
  %s8 = int_to_ptr.vmem [resolvable:$true] %s7
  %10 = dma.vmem_to_smem %s8, 16, [#allocation4], [#allocation3]
  %11 = dma.done [#allocation3], 16
  %12 = sfence
  $region1: #{preprocessing_forward.1} parent=0
    #allocation6 [shape = 'u32[3]{0}', space=smem, size = 0xc, scoped, tag = 'DMA stride descriptor']
    #allocation8 [shape = 'u32[3]{0}', space=smem, size = 0xc, scoped, tag = 'DMA stride descriptor']
    #allocation10 [shape = 'u32[3]{0}', space=smem, size = 0xc, scoped, tag = 'DMA stride descriptor']
    #allocation12 [shape = 'u32[3]{0}', space=smem, size = 0xc, scoped, tag = 'DMA stride descriptor']
    #allocation14 [shape = 'u32[3]{0}', space=smem, size = 0xc, scoped, tag = 'DMA stride descriptor']
    #allocation16 [shape = 'u32[3]{0}', space=smem, size = 0xc, scoped, tag = 'DMA stride descriptor']
    #allocation18 [shape = 'u32[3]{0}', space=smem, size = 0xc, scoped, tag = 'DMA stride descriptor']
    #allocation20 [shape = 'u32[3]{0}', space=smem, size = 0xc, scoped, tag = 'DMA stride descriptor']
    %s13 = sld [smem:[#allocation4]]
    %p14 = scmp.gt.s32.totalorder %s13, 0
    %s15 = scalar_select %p14, %s13, 0
    %p16 = scmp.lt.s32.totalorder %s15, 29999
    %s17 = scalar_select %p16, %s15, 29999
    %s18 = sld [smem:[#allocation4 + $0x1]]
    %p19 = scmp.gt.s32.totalorder %s18, 0
    %s20 = scalar_select %p19, %s18, 0
    %p21 = scmp.lt.s32.totalorder %s20, 29999
    %s22 = scalar_select %p21, %s20, 29999
    %s23 = sld [smem:[#allocation4 + $0x2]]
    %p24 = scmp.gt.s32.totalorder %s23, 0
    %s25 = scalar_select %p24, %s23, 0
    %p26 = scmp.lt.s32.totalorder %s25, 29999
    %s27 = scalar_select %p26, %s25, 29999
    %s28 = sld [smem:[#allocation4 + $0x3]]
    %p29 = scmp.gt.s32.totalorder %s28, 0
    %s30 = scalar_select %p29, %s28, 0
    %p31 = scmp.lt.s32.totalorder %s30, 29999
    %s32 = scalar_select %p31, %s30, 29999
    %s33 = sld [smem:[#allocation4 + $0x4]]
    %p34 = scmp.gt.s32.totalorder %s33, 0
    %s35 = scalar_select %p34, %s33, 0
    %p36 = scmp.lt.s32.totalorder %s35, 29999
    %s37 = scalar_select %p36, %s35, 29999
    %s39 = sshll.u32 1, 14
    %s40 = sxor.u32 4294967295, %s39
    %44 = sst [smem:[#allocation6]] 128
    %s45 = scalar_lea.smem [#allocation6], 1
    %46 = sst [smem:[%s45]] 128
    %s47 = scalar_lea.smem [#allocation6], 2
    %48 = sst [smem:[%s47]] 1
    %50 = dma.general %s1, 96, %s2, [#allocation2], 131072, [#allocation6], 0, 0
    %s51 = scalar_lea.hbm %s2, 16
    %s53 = sshll.u32 1, 14
    %s54 = sxor.u32 4294967295, %s53
    %58 = sst [smem:[#allocation8]] 128
    %s59 = scalar_lea.smem [#allocation8], 1
    %60 = sst [smem:[%s59]] 128
    %s61 = scalar_lea.smem [#allocation8], 2
    %62 = sst [smem:[%s61]] 1
    %64 = dma.general %s1, 96, %s51, [#allocation2], 131072, [#allocation8], 0, 0
    %s65 = scalar_lea.hbm %s2, 32
    %s67 = sshll.u32 1, 14
    %s68 = sxor.u32 4294967295, %s67
    %72 = sst [smem:[#allocation10]] 128
    %s73 = scalar_lea.smem [#allocation10], 1
    %74 = sst [smem:[%s73]] 128
    %s75 = scalar_lea.smem [#allocation10], 2
    %76 = sst [smem:[%s75]] 1
    %78 = dma.general %s1, 96, %s65, [#allocation2], 131072, [#allocation10], 0, 0
    %s79 = sshrl.u32 %s17, 3
    %s80 = sand.u32 %s17, 7
    %s81 = smul.u32 %s79, 48
    %s82 = sadd.s32 %s80, %s81
    %s83 = smul.addr %s82, 16
    %s84 = scalar_lea.hbm %s1, %s83
    %s85 = scalar_lea.hbm %s2, 48
    %s87 = sshll.u32 1, 14
    %s88 = sxor.u32 4294967295, %s87
    %92 = sst [smem:[#allocation12]] 128
    %s93 = scalar_lea.smem [#allocation12], 1
    %94 = sst [smem:[%s93]] 128
    %s95 = scalar_lea.smem [#allocation12], 2
    %96 = sst [smem:[%s95]] 1
    %98 = dma.general %s84, 96, %s85, [#allocation2], 131072, [#allocation12], 0, 0
    %s99 = sshrl.u32 %s22, 3
    %s100 = sand.u32 %s22, 7
    %s101 = smul.u32 %s99, 48
    %s102 = sadd.s32 %s100, %s101
    %s103 = smul.addr %s102, 16
    %s104 = scalar_lea.hbm %s1, %s103
    %s105 = scalar_lea.hbm %s2, 64
    %s107 = sshll.u32 1, 14
    %s108 = sxor.u32 4294967295, %s107
    %112 = sst [smem:[#allocation14]] 128
    %s113 = scalar_lea.smem [#allocation14], 1
    %114 = sst [smem:[%s113]] 128
    %s115 = scalar_lea.smem [#allocation14], 2
    %116 = sst [smem:[%s115]] 1
    %118 = dma.general %s104, 96, %s105, [#allocation2], 131072, [#allocation14], 0, 0
    %s119 = sshrl.u32 %s27, 3
    %s120 = sand.u32 %s27, 7
    %s121 = smul.u32 %s119, 48
    %s122 = sadd.s32 %s120, %s121
    %s123 = smul.addr %s122, 16
    %s124 = scalar_lea.hbm %s1, %s123
    %s125 = scalar_lea.hbm %s2, 80
    %s127 = sshll.u32 1, 14
    %s128 = sxor.u32 4294967295, %s127
    %132 = sst [smem:[#allocation16]] 128
    %s133 = scalar_lea.smem [#allocation16], 1
    %134 = sst [smem:[%s133]] 128
    %s135 = scalar_lea.smem [#allocation16], 2
    %136 = sst [smem:[%s135]] 1
    %138 = dma.general %s124, 96, %s125, [#allocation2], 131072, [#allocation16], 0, 0
    %s139 = sshrl.u32 %s32, 3
    %s140 = sand.u32 %s32, 7
    %s141 = smul.u32 %s139, 48
    %s142 = sadd.s32 %s140, %s141
    %s143 = smul.addr %s142, 16
    %s144 = scalar_lea.hbm %s1, %s143
    %s145 = scalar_lea.hbm %s2, 96
    %s147 = sshll.u32 1, 14
    %s148 = sxor.u32 4294967295, %s147
    %152 = sst [smem:[#allocation18]] 128
    %s153 = scalar_lea.smem [#allocation18], 1
    %154 = sst [smem:[%s153]] 128
    %s155 = scalar_lea.smem [#allocation18], 2
    %156 = sst [smem:[%s155]] 1
    %158 = dma.general %s144, 96, %s145, [#allocation2], 131072, [#allocation18], 0, 0
    %s159 = sshrl.u32 %s37, 3
    %s160 = sand.u32 %s37, 7
    %s161 = smul.u32 %s159, 48
    %s162 = sadd.s32 %s160, %s161
    %s163 = smul.addr %s162, 16
    %s164 = scalar_lea.hbm %s1, %s163
    %s165 = scalar_lea.hbm %s2, 112
    %s167 = sshll.u32 1, 14
    %s168 = sxor.u32 4294967295, %s167
    %172 = sst [smem:[#allocation20]] 128
    %s173 = scalar_lea.smem [#allocation20], 1
    %174 = sst [smem:[%s173]] 128
    %s175 = scalar_lea.smem [#allocation20], 2
    %176 = sst [smem:[%s175]] 1
    %178 = dma.general %s164, 96, %s165, [#allocation2], 131072, [#allocation20], 0, 0
    %180 = dma.done [#allocation2], 96
    %182 = dma.done [#allocation2], 96
    %184 = dma.done [#allocation2], 96
    %186 = dma.done [#allocation2], 96
    %188 = dma.done [#allocation2], 96
    %190 = dma.done [#allocation2], 96
    %192 = dma.done [#allocation2], 96
    %194 = dma.done [#allocation2], 96
  %195 = vsyncmov [#allocation2]
  %s196 = vpop.sfrf %195
  %p197 = scmp.eq.s32.totalorder %s196, 0
  %p198 = pneg %p197
  %200 = shalt.err (%p198)

</llo_original>
